<compile_context>
chip_gen: v7x
topology: tpu7x:2x2x1
jax: 0.10.0
libtpu: 0.0.40
codegen_flags: <defaults>
</compile_context>

<pallas_src>
import jax
import jax.numpy as jnp
from jax.experimental import pallas as pl
from jax.experimental.pallas import tpu as pltpu


def _softmax_eta_kernel(eta_ref, x_ref, o_ref):
    """eta * softmax(x, axis=0) for one (D0, TN) block (full D0 resident)."""
    x = x_ref[...].astype(jnp.float32)
    m = jnp.max(x, axis=0, keepdims=True)             # (1, TN) row (XLU reduce)
    e = jnp.exp(x - m)                                # EUP
    s = jnp.sum(e, axis=0, keepdims=True)             # (1, TN) row
    inv = pl.reciprocal(s, approx=True)               # EUP slot, ~free
    inv = inv * (2.0 - s * inv)                       # one Newton step (row-sized)
    scale = eta_ref[0, 0] * inv                       # fold eta into the row
    o_ref[...] = (e * scale).astype(o_ref.dtype)      # one full-tile VPU multiply


_INPUT_BUFFERS = 3      # pl.Buffered(3) on the input spec (tiled path)
_OUTPUT_BUFFERS = 2     # default double buffering on the output


def _vmem_budgets():
    """(tile_budget_bytes, vmem_limit_bytes) sized for the current chip."""
    try:
        cap = int(pltpu.get_tpu_info().vmem_capacity_bytes)
    except Exception:
        cap = 64 * 1024 * 1024          # conservative (v7x per-TC VMEM)
    # ~3/4 of physical VMEM as the scoped limit (<=48 MiB on v7x, 96 MiB on
    # v5e/v6e), and half of that for the resident tiles + f32 temporaries.
    vmem_limit = min(cap * 3 // 4, 96 * 1024 * 1024)
    tile_budget = vmem_limit // 2
    return tile_budget, vmem_limit


def softmax_eta(x, eta: float = 1.0, lane_tile: int | None = None):
    """eta * softmax(x, axis=0) (torch dim=0) via a Pallas TPU kernel.

    `lane_tile` optionally forces a specific lane-tile width (testing only);
    by default the tile is sized from the per-generation VMEM budget.
    """
    assert x.ndim >= 1, "softmax_eta expects at least a 1-D input"
    orig_shape = x.shape
    d0 = orig_shape[0]
    # softmax over dim 0 is independent per trailing index, so flatten all
    # trailing dims into the lane axis (exactly equivalent to torch dim=0).
    x2 = x.reshape(d0, -1)
    d1 = x2.shape[1]
    dtype = x2.dtype
    itemsize = jnp.dtype(dtype).itemsize

    tile_budget, vmem_limit = _vmem_budgets()
    eta_arr = jnp.full((1, 1), eta, dtype=jnp.float32)
    smem_spec = pl.BlockSpec(memory_space=pltpu.MemorySpace.SMEM)

    # Per lane-column cost in the tiled path: multi-buffered input tiles,
    # double-buffered output tiles, plus ~2 f32 temporaries in the kernel.
    per_col_tiled = d0 * ((_INPUT_BUFFERS + _OUTPUT_BUFFERS) * itemsize + 2 * 4)
    tn_budget = (tile_budget // per_col_tiled) // 128 * 128

    # Whole-array residency cost for the gridless path (single-buffered
    # in/out + 2 f32 temporaries).
    resident_bytes = d0 * d1 * (2 * itemsize + 2 * 4)

    if resident_bytes <= tile_budget and lane_tile is None:
        # Small / fully-resident path (e.g. the production (8, 32) case, or
        # a lane-dense stacked slab): one whole-array block, no grid, no
        # per-step pipeline overhead.
        out2 = pl.pallas_call(
            _softmax_eta_kernel,
            out_shape=jax.ShapeDtypeStruct((d0, d1), dtype),
            in_specs=[
                smem_spec,
                pl.BlockSpec(memory_space=pltpu.MemorySpace.VMEM),
            ],
            out_specs=pl.BlockSpec(memory_space=pltpu.MemorySpace.VMEM),
            compiler_params=pltpu.CompilerParams(vmem_limit_bytes=vmem_limit),
        )(eta_arr, x2)
        return out2.reshape(orig_shape)

    if tn_budget >= 128:
        # Large path: lane-tile D1 only; the full reduction axis (torch dim=0,
        # TPU sublanes) stays resident in every block so no cross-grid
        # accumulator is needed.
        if lane_tile is None:
            tn = tn_budget
        else:
            tn = max(128, min((lane_tile // 128) * 128, tn_budget))
        tn = min(tn, pl.cdiv(d1, 128) * 128)   # never wider than the array
        grid = (pl.cdiv(d1, tn),)
        out2 = pl.pallas_call(
            _softmax_eta_kernel,
            out_shape=jax.ShapeDtypeStruct((d0, d1), dtype),
            grid=grid,
            in_specs=[
                smem_spec,
                pl.BlockSpec((d0, tn), lambda j: (0, j),
                             pipeline_mode=pl.Buffered(_INPUT_BUFFERS)),
            ],
            out_specs=pl.BlockSpec((d0, tn), lambda j: (0, j)),
            compiler_params=pltpu.CompilerParams(
                dimension_semantics=("parallel",),   # shards tiles over v7x's 2 TCs
                vmem_limit_bytes=vmem_limit,
            ),
        )(eta_arr, x2)
        return out2.reshape(orig_shape)

    # Guard: even a (d0, 128) block (plus buffering + f32 temporaries) exceeds
    # the VMEM budget (very large d0). Fall back to XLA instead of failing.
    # TODO(synk): d0-tiled two-pass / online softmax for the huge-d0 case.
    out2 = (eta * jax.nn.softmax(x2.astype(jnp.float32), axis=0)).astype(dtype)
    return out2.reshape(orig_shape)


def softmax_eta_stacked(xs, eta: float = 1.0):
    """Apply eta*softmax(., dim=0) to many matrices sharing the same leading
    dim with ONE lane-dense pallas_call (amortizes dispatch, unmasked stores).
    """
    d0 = xs[0].shape[0]
    flats = [xi.reshape(d0, -1) for xi in xs]
    widths = [f.shape[1] for f in flats]
    slab = jnp.concatenate(flats, axis=1)
    out_slab = softmax_eta(slab, eta=eta)
    outs, off = [], 0
    for xi, w in zip(xs, widths):
        outs.append(out_slab[:, off:off + w].reshape(xi.shape))
        off += w
    return outs


if __name__ == "__main__":
    key = jax.random.PRNGKey(0)
    k1, k2, k3, k4, k5 = jax.random.split(key, 5)

    # 1) Production-like tiny shape: softmax over dim 0 of an (8, 32) matrix.
    x = jax.random.normal(k1, (8, 32), dtype=jnp.float32)
    eta = 1.5
    out = jax.block_until_ready(softmax_eta(x, eta=eta))
    ref = eta * jax.nn.softmax(x, axis=0)
    assert out.shape == x.shape and out.dtype == x.dtype
    assert jnp.allclose(out, ref, atol=1e-4, rtol=1e-4)

    # 2) Lane-dense batched call: 4 tiny (8, 32) matrices in one (8, 128) slab.
    xs = [jax.random.normal(jax.random.fold_in(k2, i), (8, 32), dtype=jnp.float32)
          for i in range(4)]
    outs = softmax_eta_stacked(xs, eta=eta)
    for xi, oi in zip(xs, outs):
        jax.block_until_ready(oi)
        assert jnp.allclose(oi, eta * jax.nn.softmax(xi, axis=0),
                            atol=1e-4, rtol=1e-4)

    # 3) 3-D input (flattened trailing dims), gridless resident path.
    x3 = jax.random.normal(k3, (8, 4, 16), dtype=jnp.float32)
    out3 = jax.block_until_ready(softmax_eta(x3, eta=0.5))
    assert out3.shape == x3.shape
    assert jnp.allclose(out3, 0.5 * jax.nn.softmax(x3, axis=0),
                        atol=1e-4, rtol=1e-4)

    # 4) Exercise the lane-tiled, parallel-grid path (forced small lane tile).
    x4 = jax.random.normal(k4, (8, 1024), dtype=jnp.float32)
    out4 = jax.block_until_ready(softmax_eta(x4, eta=2.0, lane_tile=256))
    assert jnp.allclose(out4, 2.0 * jax.nn.softmax(x4, axis=0),
                        atol=1e-4, rtol=1e-4)

    # 5) bf16 input (dtype preserved on the output).
    x5 = jax.random.normal(k5, (16, 384), dtype=jnp.bfloat16)
    out5 = jax.block_until_ready(softmax_eta(x5, eta=1.25))
    ref5 = 1.25 * jax.nn.softmax(x5.astype(jnp.float32), axis=0)
    assert out5.dtype == jnp.bfloat16
    assert jnp.allclose(out5.astype(jnp.float32), ref5, atol=2e-2, rtol=2e-2)

    print("KERNEL_OK")
</pallas_src>

<mosaic_0001>
module attributes {stable_mosaic.version = 11 : i64} {
  func.func @_softmax_eta_kernel(%arg0: memref<1x1xf32, #tpu.memory_space<smem>>, %arg1: memref<8x32xf32, #tpu.memory_space<vmem>>, %arg2: memref<8x32xf32, #tpu.memory_space<vmem>>) attributes {dimension_semantics = [], scalar_prefetch = 0 : i64, scratch_operands = 0 : i64, tpu.core_type = #tpu.core_type<tc>} {
    %c0 = arith.constant 0 : index
    %c0_0 = arith.constant 0 : index
    %0 = vector.load %arg1[%c0, %c0_0] : memref<8x32xf32, #tpu.memory_space<vmem>>, vector<8x32xf32>
    %cst = arith.constant dense<0xFF800000> : vector<32xf32>
    %1 = vector.multi_reduction <maximumf>, %0, %cst [0] : vector<8x32xf32> to vector<32xf32>
    %2 = vector.shape_cast %1 : vector<32xf32> to vector<1x32xf32>
    %3 = vector.broadcast %2 : vector<1x32xf32> to vector<8x32xf32>
    %4 = arith.subf %0, %3 : vector<8x32xf32>
    %5 = math.exp %4 : vector<8x32xf32>
    %cst_1 = arith.constant dense<0.000000e+00> : vector<32xf32>
    %6 = vector.multi_reduction <add>, %5, %cst_1 [0] : vector<8x32xf32> to vector<32xf32>
    %7 = vector.shape_cast %6 : vector<32xf32> to vector<1x32xf32>
    %8 = tpu.reciprocal %7 {approx = true} : vector<1x32xf32> -> vector<1x32xf32>
    %9 = arith.mulf %7, %8 : vector<1x32xf32>
    %cst_2 = arith.constant 2.000000e+00 : f32
    %10 = vector.broadcast %cst_2 : f32 to vector<1x32xf32>
    %11 = arith.subf %10, %9 : vector<1x32xf32>
    %12 = arith.mulf %8, %11 : vector<1x32xf32>
    %c0_3 = arith.constant 0 : index
    %c0_4 = arith.constant 0 : index
    %13 = memref.load %arg0[%c0_3, %c0_4] : memref<1x1xf32, #tpu.memory_space<smem>>
    %14 = vector.broadcast %13 : f32 to vector<1x32xf32>
    %15 = arith.mulf %14, %12 : vector<1x32xf32>
    %16 = vector.broadcast %15 : vector<1x32xf32> to vector<8x32xf32>
    %17 = arith.mulf %5, %16 : vector<8x32xf32>
    %c0_5 = arith.constant 0 : index
    %c0_6 = arith.constant 0 : index
    %18 = vector.load %arg2[%c0_5, %c0_6] : memref<8x32xf32, #tpu.memory_space<vmem>>, vector<8x32xf32>
    tpu.vector_store %arg2[%c0_5, %c0_6], %17 {strides = array<i32>} : memref<8x32xf32, #tpu.memory_space<vmem>>, vector<8x32xf32>,
    return
  }
}

</mosaic_0001>

<llo_original>
// kernel: tpu_custom_call.1
$region0: #{tpu_custom_call.1}
  #allocation0 [shape = 'u32[]', space=smem, size = 0x4, offset = 0x4, fixed_abs, tag = 'smem constant byte address 0x4 - core index']
  #allocation1 [shape = 'u32[144,128]{1,0:T(1,128)}', space=vmem, size = 0x12000, scoped, tag = 'internal scratch']
  #allocation2 [shape = 'f32[1,1]{1,0:T(1,128)S(6)}', space=smem, size = 0x200, scoped, tag = 'scoped memory for tpu_custom_call.1']
  %s0 = inlined_call_operand.<no memory space> [shape: f32[1,1], index: 0, kind: input, shape index: {}]
  %s1 = inlined_call_operand.hbm [shape: f32[8,32], index: 1, kind: input, shape index: {}]
  %s2 = inlined_call_operand.hbm [shape: f32[8,32], index: 2, kind: output, shape index: {}]
  %s3 = sld [smem:[#allocation0]]
  $region22: #{tpu_custom_call.1} parent=0
    _
  %s5 = ssub.s32 1, %s3
  %s6 = scalar_select 0, %s5, %s3
  %7 = sst [smem:[#allocation2]] %s0
  $region1: #{tpu_custom_call.1} parent=0
    #allocation3 [shape = 'u8[4096]{0}', space=vmem, size = 0x1000, scoped, tag = 'input window, operand 1, single buffered']
    #allocation4 [shape = 's32[1]{0}', space=sflag, size = 0x4, scoped, tag = 'scoped memory for tpu_custom_call.1']
    #allocation5 [shape = 's32[1]{0}', space=sflag, size = 0x4, scoped, tag = 'scoped memory for tpu_custom_call.1']
    #allocation6 [shape = 'u8[4096]{0}', space=vmem, size = 0x1000, scoped, tag = 'output window, operand 0, single buffered']
    %8 = vsyncpa [#allocation4], 0
    %9 = vsyncpa [#allocation5], 0
    // Predicated region
    $region2: #{tpu_custom_call.1} parent=1 // pred_check
      _
    $region3: #{tpu_custom_call.1} parent=1 // pred_check_branch
      %11 = sbr.rel (0) target = $region5
    $region4: #{tpu_custom_call.1} parent=1 // pred_region
      _
    $region5: #{tpu_custom_call.1} parent=1 // pred_fallthru
      _
    // Predicated region
    $region6: #{tpu_custom_call.1} parent=1 // pred_check
      _
    $region7: #{tpu_custom_call.1} parent=1 // pred_check_branch
      %13 = sbr.rel (0) target = $region9
    $region8: #{tpu_custom_call.1} parent=1 // pred_region
      %s15 = ssub.s32 128, 128
      %16 = vsyncadd [#allocation4], %s15
      %s18 = sshll.u32 [#allocation3], 4
      %s19 = int_to_ptr.vmem [resolvable:$true] %s18
      %21 = dma.hbm_to_vmem [thread:$0]  %s1, 128, %s19, [#allocation4]
    $region9: #{tpu_custom_call.1} parent=1 // pred_fallthru
      _
    // Predicated region
    $region10: #{tpu_custom_call.1} parent=1 // pred_check
      _
    $region11: #{tpu_custom_call.1} parent=1 // pred_check_branch
      %23 = sbr.rel (0) target = $region13
    $region12: #{tpu_custom_call.1} parent=1 // pred_region
      %24 = dma.done [#allocation4], 128
    $region13: #{tpu_custom_call.1} parent=1 // pred_fallthru
      _
    %v25 = vld [vmem:[#allocation3] sm:$0xff]
    %vm26 = vcmask 261120
    %v27 = vsel %vm26, %v25, -inf
    %v28 = vrot.slane %v27, 4
    %v29 = vmax.f32 %v27, %v28
    %v30 = vrot.slane %v29, 2
    %v31 = vmax.f32 %v29, %v30
    %v32 = vrot.slane %v31, 1
    %v33 = vmax.f32 %v31, %v32
    %v34 = vsub.f32 %v25, %v33
    %v35 = vmul.f32 %v34, 1.442695
    %v36 = vpow.pop %v35
    %v37 = vsel %vm26, %v36, 0.0
    %v38 = vrot.slane %v37, 4
    %v39 = vadd.f32 %v37, %v38
    %v40 = vrot.slane %v39, 2
    %v41 = vadd.f32 %v39, %v40
    %v42 = vrot.slane %v41, 1
    %v43 = vadd.f32 %v41, %v42
    %v44 = vrcp.pop %v43
    %v45 = vmul.f32 %v43, %v44
    %v46 = vsub.f32 2.0, %v45
    %v47 = vmul.f32 %v44, %v46
    %s48 = sld [smem:[#allocation2]]
    %v49 = vstv %s48
    %v50 = vmul.f32 %v49, %v47
    %v51 = vmul.f32 %v36, %v50
    %52 = vst.msk [vmem:[#allocation6] sm:$0xff] %vm26, %v51
    // Predicated region
    $region14: #{tpu_custom_call.1} parent=1 // pred_check
      _
    $region15: #{tpu_custom_call.1} parent=1 // pred_check_branch
      %54 = sbr.rel (0) target = $region17
    $region16: #{tpu_custom_call.1} parent=1 // pred_region
      %s56 = ssub.s32 128, 128
      %57 = vsyncadd [#allocation5], %s56
      %s59 = sshll.u32 [#allocation6], 4
      %s60 = int_to_ptr.vmem [resolvable:$true] %s59
      %62 = dma.vmem_to_hbm [thread:$0]  %s60, 128, %s2, [#allocation5]
    $region17: #{tpu_custom_call.1} parent=1 // pred_fallthru
      _
    // Predicated region
    $region18: #{tpu_custom_call.1} parent=1 // pred_check
      _
    $region19: #{tpu_custom_call.1} parent=1 // pred_check_branch
      %64 = sbr.rel (0) target = $region21
    $region20: #{tpu_custom_call.1} parent=1 // pred_region
      %65 = dma.done [#allocation5], 128
    $region21: #{tpu_custom_call.1} parent=1 // pred_fallthru
      _
    %66 = vsyncpa [#allocation4], 1
    %67 = vsyncpa [#allocation5], 1

</llo_original>
